<compile_context>
chip_gen: v5e
topology: v5e:2x2
jax: 0.10.0
libtpu: 0.0.40
codegen_flags: <defaults>
</compile_context>

<pallas_src>
import functools
import numpy as np
import jax
import jax.numpy as jnp
from jax.experimental import pallas as pl
from jax.experimental.pallas import tpu as pltpu


def _round_up(x, m):
    return ((x + m - 1) // m) * m


def _gelu(x):
    # exact erf-based GELU == torch.nn.GELU() default (numerics parity with torch)
    # TODO(synk): switch to jax.nn.gelu(approximate=True) (tanh -> EUP) if numerics allow.
    return 0.5 * x * (1.0 + jax.lax.erf(x * 0.7071067811865476))


# ---------------------------------------------------------------------------
# Pallas kernel: fused 5-layer MLP (block-diag heads) + residual + rotation.
# ---------------------------------------------------------------------------
def _fused_heads_kernel(x_ref, w1, b1, w2, b2, w3, b3, w4, b4, w5, b5,
                        out_ref, *, dcat):
    x = x_ref[...]                          # (TB, 128) act dtype; cols [0:9] == flat(Ftmp)
    h = x
    for w_r, b_r in ((w1, b1), (w2, b2), (w3, b3), (w4, b4)):
        w = w_r[...]
        z = jnp.dot(h, w, preferred_element_type=jnp.float32) + b_r[...]
        h = _gelu(z).astype(w.dtype)
    o = jnp.dot(h, w5[...], preferred_element_type=jnp.float32) + b5[...]   # (TB, 36) f32

    # Fproj = Ftmp + fproj-head output (Ftmp_flat is the first 9 cols of the slab).
    fproj = x[:, :9].astype(jnp.float32) + o[:, :9]

    # stress = R @ (0.5*(S + S^T)); symmetrize + column gather folded into w5/b5,
    # so the rotation is three width-9 elementwise FMAs.
    rp = x[:, dcat:dcat + 27].astype(jnp.float32)
    stress = (rp[:, 0:9] * o[:, 9:18]
              + rp[:, 9:18] * o[:, 18:27]
              + rp[:, 18:27] * o[:, 27:36])

    # Two sliced stores; no in-kernel concatenate.
    out_ref[:, 0:9] = fproj.astype(out_ref.dtype)
    out_ref[:, 9:18] = stress.astype(out_ref.dtype)


# ---------------------------------------------------------------------------
# Parameter construction / fusion.
# ---------------------------------------------------------------------------
def init_params(key, hidden_size, embed_dim):
    """Torch-like nn.Linear init (same shapes as the torch module)."""
    dims_fproj = [27 + 3 + embed_dim] + [hidden_size] * 4 + [9]
    dims_stress = [16 + 9 + embed_dim] + [hidden_size] * 4 + [9]

    def make(key, dims):
        layers = []
        for i in range(5):
            key, k1, k2 = jax.random.split(key, 3)
            bound = float(dims[i]) ** -0.5
            w = jax.random.uniform(k1, (dims[i], dims[i + 1]), jnp.float32, -bound, bound)
            b = jax.random.uniform(k2, (1, dims[i + 1]), jnp.float32, -bound, bound)
            layers.append((w, b))
        return key, layers

    key, fproj_layers = make(key, dims_fproj)
    key, stress_layers = make(key, dims_stress)
    return fproj_layers, stress_layers


def _stress_fold_matrix():
    """(9, 27) constant M with  s @ M == [sym@P0 | sym@P1 | sym@P2], where
    sym = 0.5*(S + S^T) (row-major flat) and (sym@Pj)[:, 3*i + k] == sym[:, 3*j + k],
    so that (R @ sym)[i, k] = sum_j R[i, j] * sym[j, k] becomes 3 elementwise FMAs."""
    T = np.zeros((9, 9), np.float32)
    for a in range(3):
        for b in range(3):
            T[3 * a + b, 3 * b + a] = 1.0
    s_half = 0.5 * (np.eye(9, dtype=np.float32) + T)
    blocks = []
    for j in range(3):
        P = np.zeros((9, 9), np.float32)
        for m in range(9):
            P[3 * j + (m % 3), m] = 1.0
        blocks.append(s_half @ P)
    return jnp.asarray(np.concatenate(blocks, axis=-1))


def fuse_params(fproj_layers, stress_layers, d_in_padded, use_bf16=True):
    """Merge both heads into one block-diagonal 5-layer chain.  The first layer's
    input dim is zero-padded to the streamed slab width (rp + pad rows are zero);
    the final stress block folds in the symmetrize + gather matrix."""
    wdt = jnp.bfloat16 if use_bf16 else jnp.float32
    hi = jax.lax.Precision.HIGHEST

    wf1, bf1 = fproj_layers[0]
    ws1, bs1 = stress_layers[0]
    di_f, hf = wf1.shape
    di_s, hs = ws1.shape
    w1 = jnp.zeros((d_in_padded, hf + hs), jnp.float32)
    w1 = w1.at[:di_f, :hf].set(wf1)
    w1 = w1.at[di_f:di_f + di_s, hf:].set(ws1)
    b1 = jnp.concatenate([bf1, bs1], axis=-1)
    fused = [(w1.astype(wdt), b1.astype(jnp.float32))]

    for li in range(1, 4):
        wf, bf = fproj_layers[li]
        ws, bs = stress_layers[li]
        df, of = wf.shape
        ds_, os_ = ws.shape
        w = jnp.zeros((df + ds_, of + os_), jnp.float32)
        w = w.at[:df, :of].set(wf)
        w = w.at[df:, of:].set(ws)
        b = jnp.concatenate([bf, bs], axis=-1)
        fused.append((w.astype(wdt), b.astype(jnp.float32)))

    wf5, bf5 = fproj_layers[4]            # (H, 9), (1, 9)
    ws5, bs5 = stress_layers[4]           # (H, 9), (1, 9)
    mcat = _stress_fold_matrix()          # (9, 27)
    ws5_f = jnp.matmul(ws5, mcat, precision=hi)    # (H, 27)
    bs5_f = jnp.matmul(bs5, mcat, precision=hi)    # (1, 27)
    hft, hst = wf5.shape[0], ws5.shape[0]
    w5 = jnp.zeros((hft + hst, 9 + 27), jnp.float32)
    w5 = w5.at[:hft, :9].set(wf5)
    w5 = w5.at[hft:, 9:].set(ws5_f)
    b5 = jnp.concatenate([bf5, bs5_f], axis=-1)
    fused.append((w5.astype(wdt), b5.astype(jnp.float32)))
    return fused


# ---------------------------------------------------------------------------
# Feature engineering glue (shared by kernel path and pure-JAX reference).
# ---------------------------------------------------------------------------
def _features(Ftmp, F, C, latent_table, traj_ids):
    # TODO(synk): batched 3x3 SVD / det / embedding lookup have no clean Pallas
    # equivalent; they stay as plain-JAX ops outside the kernel.
    B = Ftmp.shape[0]
    flat = lambda m: m.reshape(B, 9)

    latent_particles = latent_table[traj_ids]                     # (B, embed_dim)

    Uf, sigf, Vhf = jnp.linalg.svd(Ftmp)
    xf = jnp.concatenate([flat(Ftmp), flat(Uf), sigf, flat(Vhf), latent_particles],
                         axis=-1)                                 # (B, 30 + embed)

    FtF = jnp.matmul(jnp.transpose(F, (0, 2, 1)), F)
    J = jnp.maximum(jnp.linalg.det(F), 1e-6)[:, None]
    J1 = jnp.maximum(F[:, 0, 0], 1e-6)[:, None]
    U, sig, Vh = jnp.linalg.svd(F)
    # torch.svd returns V (not V^T); the module computes R = torch.matmul(U, V).
    R = jnp.matmul(U, jnp.transpose(Vh, (0, 2, 1)))
    strain = jnp.concatenate([sig, flat(FtF), J, jnp.log(J), J1, jnp.log(J1)], axis=-1)
    xs = jnp.concatenate([strain, flat(C), latent_particles], axis=-1)  # (B, 25+embed)
    return xf, xs, R


# ---------------------------------------------------------------------------
# Forward pass (kernel path).
# ---------------------------------------------------------------------------
def fproj_stress_forward(Ftmp, F, C, latent_table, traj_ids,
                         fproj_layers, stress_layers,
                         use_bf16=True, tile_rows=2048):
    B = Ftmp.shape[0]
    xf, xs, R = _features(Ftmp, F, C, latent_table, traj_ids)

    # Pre-gathered rotation operand: rp[:, 9*j + 3*i + k] == R[:, i, j].
    rows = np.array([0, 0, 0, 1, 1, 1, 2, 2, 2])
    rp = jnp.concatenate([R[:, rows, j] for j in range(3)], axis=-1)    # (B, 27)

    dcat = xf.shape[1] + xs.shape[1]
    d_in = _round_up(dcat + 27, 128)          # one lane-dense streamed slab
    act_dtype = jnp.bfloat16 if use_bf16 else jnp.float32
    act_isz = jnp.dtype(act_dtype).itemsize

    # Even grid of >= 2 steps (megacore sharding on v7x), balanced row tiles.
    n_steps = max(2, pl.cdiv(B, tile_rows))
    if n_steps % 2:
        n_steps += 1
    tb = _round_up(pl.cdiv(B, n_steps), 8)    # multiple of 8 sublanes
    b_pad = n_steps * tb

    slab = jnp.concatenate([xf, xs, rp], axis=-1).astype(act_dtype)     # (B, dcat+27)
    slab = jnp.pad(slab, ((0, b_pad - B), (0, d_in - (dcat + 27))))     # (b_pad, d_in)

    fused = fuse_params(fproj_layers, stress_layers, d_in, use_bf16=use_bf16)
    hidden_fused = int(fused[0][0].shape[1])

    in_specs = [pl.BlockSpec((tb, d_in), lambda i: (i, 0))]
    flat_params = []
    for w, b in fused:
        in_specs.append(pl.BlockSpec(w.shape, lambda i: (0, 0)))   # VMEM-resident
        in_specs.append(pl.BlockSpec(b.shape, lambda i: (0, 0)))
        flat_params += [w, b]
    out_specs = pl.BlockSpec((tb, 18), lambda i: (i, 0))

    # --- padded VMEM accounting (round last dims to 128 lanes, x2 buffers) ---
    lane = lambda n: _round_up(int(n), 128)
    in_bytes = 2 * tb * lane(d_in) * act_isz                 # double-buffered input slab
    out_bytes = 2 * tb * lane(18) * 4                        # double-buffered f32 output
    w_bytes = 0
    for w, b in fused:
        w_isz = jnp.dtype(w.dtype).itemsize
        w_bytes += 2 * (_round_up(int(w.shape[0]), 32 // w_isz) * lane(w.shape[1]) * w_isz
                        + 8 * lane(b.shape[1]) * 4)
    interm_bytes = 6 * tb * lane(max(hidden_fused, 36)) * 4  # live f32 layer intermediates
    vmem_limit = int(min(64 << 20,
                         max(16 << 20,
                             in_bytes + out_bytes + w_bytes + interm_bytes + (2 << 20))))

    macs_per_row = sum(int(w.shape[0]) * int(w.shape[1]) for w, _ in fused)
    io_bytes = (b_pad * d_in * act_isz + b_pad * 18 * 4
                + sum(int(w.size) * jnp.dtype(w.dtype).itemsize + int(b.size) * 4
                      for w, b in fused))
    cost = pl.CostEstimate(flops=2 * b_pad * macs_per_row + 6 * b_pad * 9,
                           transcendentals=4 * b_pad * hidden_fused,
                           bytes_accessed=int(io_bytes))

    kernel = functools.partial(_fused_heads_kernel, dcat=dcat)
    out = pl.pallas_call(
        kernel,
        out_shape=jax.ShapeDtypeStruct((b_pad, 18), jnp.float32),
        grid=(n_steps,),
        in_specs=in_specs,
        out_specs=out_specs,
        compiler_params=pltpu.CompilerParams(
            dimension_semantics=("parallel",),   # megacore-shardable batch axis
            vmem_limit_bytes=vmem_limit,
        ),
        cost_estimate=cost,
    )(slab, *flat_params)

    out = out[:B]
    return out[:, :9].reshape(B, 3, 3), out[:, 9:].reshape(B, 3, 3)


# ---------------------------------------------------------------------------
# Pure-JAX reference (matches the torch module's math) for a sanity check.
# ---------------------------------------------------------------------------
def reference_forward(Ftmp, F, C, latent_table, traj_ids, fproj_layers, stress_layers):
    B = Ftmp.shape[0]
    xf, xs, R = _features(Ftmp, F, C, latent_table, traj_ids)

    def mlp(x, layers):
        h = x
        for idx, (w, b) in enumerate(layers):
            h = h @ w + b
            if idx < len(layers) - 1:
                h = _gelu(h)
        return h

    Fproj = Ftmp + mlp(xf, fproj_layers).reshape(B, 3, 3)
    s = mlp(xs, stress_layers).reshape(B, 3, 3)
    sym = 0.5 * (s + jnp.transpose(s, (0, 2, 1)))
    return Fproj, jnp.matmul(R, sym)


if __name__ == "__main__":
    key = jax.random.PRNGKey(0)
    B, hidden_size, embed_dim, num_traj = 8, 32, 8, 4
    k1, k2, k3, k4, k5, k6 = jax.random.split(key, 6)

    # well-conditioned deformation gradients so det(F), F[0,0] > 0
    Ftmp = jnp.eye(3, dtype=jnp.float32)[None] + 0.1 * jax.random.normal(k1, (B, 3, 3), jnp.float32)
    F    = jnp.eye(3, dtype=jnp.float32)[None] + 0.1 * jax.random.normal(k2, (B, 3, 3), jnp.float32)
    C    = 0.1 * jax.random.normal(k3, (B, 3, 3), jnp.float32)
    latent_table = 0.1 * jax.random.normal(k4, (num_traj, embed_dim), jnp.float32)
    traj_ids = jax.random.randint(k5, (B,), 0, num_traj)

    fproj_layers, stress_layers = init_params(k6, hidden_size, embed_dim)

    Fproj, stress_sym = fproj_stress_forward(
        Ftmp, F, C, latent_table, traj_ids, fproj_layers, stress_layers,
        use_bf16=True)
    jax.block_until_ready((Fproj, stress_sym))

    Fproj_ref, stress_ref = reference_forward(
        Ftmp, F, C, latent_table, traj_ids, fproj_layers, stress_layers)
    jax.block_until_ready((Fproj_ref, stress_ref))

    assert Fproj.shape == (B, 3, 3) and stress_sym.shape == (B, 3, 3)
    assert jnp.allclose(Fproj, Fproj_ref, atol=5e-2, rtol=5e-2)
    assert jnp.allclose(stress_sym, stress_ref, atol=5e-2, rtol=5e-2)
    print("KERNEL_OK")
</pallas_src>

<mosaic_0001>
module attributes {stable_mosaic.version = 11 : i64} {
  func.func @_fused_heads_kernel(%arg0: i32, %arg1: memref<8x128xbf16, #tpu.memory_space<vmem>>, %arg2: memref<128x64xbf16, #tpu.memory_space<vmem>>, %arg3: memref<1x64xf32, #tpu.memory_space<vmem>>, %arg4: memref<64x64xbf16, #tpu.memory_space<vmem>>, %arg5: memref<1x64xf32, #tpu.memory_space<vmem>>, %arg6: memref<64x64xbf16, #tpu.memory_space<vmem>>, %arg7: memref<1x64xf32, #tpu.memory_space<vmem>>, %arg8: memref<64x64xbf16, #tpu.memory_space<vmem>>, %arg9: memref<1x64xf32, #tpu.memory_space<vmem>>, %arg10: memref<64x36xbf16, #tpu.memory_space<vmem>>, %arg11: memref<1x36xf32, #tpu.memory_space<vmem>>, %arg12: memref<8x18xf32, #tpu.memory_space<vmem>>) attributes {dimension_semantics = [#tpu.dimension_semantics<parallel>], iteration_bounds = array<i64: 2>, scalar_prefetch = 0 : i64, scratch_operands = 0 : i64, tpu.core_type = #tpu.core_type<tc>, window_params = [{transform_indices = @transform_0, window_bounds = array<i64: 8, 128>}, {pipeline_mode = #tpu.pipeline_mode<synchronous>, transform_indices = @transform_1, window_bounds = array<i64: 128, 64>}, {pipeline_mode = #tpu.pipeline_mode<synchronous>, transform_indices = @transform_2, window_bounds = array<i64: 1, 64>}, {pipeline_mode = #tpu.pipeline_mode<synchronous>, transform_indices = @transform_3, window_bounds = array<i64: 64, 64>}, {pipeline_mode = #tpu.pipeline_mode<synchronous>, transform_indices = @transform_4, window_bounds = array<i64: 1, 64>}, {pipeline_mode = #tpu.pipeline_mode<synchronous>, transform_indices = @transform_5, window_bounds = array<i64: 64, 64>}, {pipeline_mode = #tpu.pipeline_mode<synchronous>, transform_indices = @transform_6, window_bounds = array<i64: 1, 64>}, {pipeline_mode = #tpu.pipeline_mode<synchronous>, transform_indices = @transform_7, window_bounds = array<i64: 64, 64>}, {pipeline_mode = #tpu.pipeline_mode<synchronous>, transform_indices = @transform_8, window_bounds = array<i64: 1, 64>}, {pipeline_mode = #tpu.pipeline_mode<synchronous>, transform_indices = @transform_9, window_bounds = array<i64: 64, 36>}, {pipeline_mode = #tpu.pipeline_mode<synchronous>, transform_indices = @transform_10, window_bounds = array<i64: 1, 36>}, {transform_indices = @transform_11, window_bounds = array<i64: 8, 18>}]} {
    %c0 = arith.constant 0 : index
    %c0_0 = arith.constant 0 : index
    %0 = vector.load %arg1[%c0, %c0_0] : memref<8x128xbf16, #tpu.memory_space<vmem>>, vector<8x128xbf16>
    %c0_1 = arith.constant 0 : index
    %c0_2 = arith.constant 0 : index
    %1 = vector.load %arg2[%c0_1, %c0_2] : memref<128x64xbf16, #tpu.memory_space<vmem>>, vector<128x64xbf16>
    %cst = arith.constant dense<0.000000e+00> : vector<8x64xf32>
    %2 = tpu.matmul %0, %1, %cst {dimension_numbers = #tpu.dot_dimension_numbers<[1], [0], [0], [1], [0, 0, 1, 1], [], []>} : vector<8x128xbf16>, vector<128x64xbf16>, vector<8x64xf32> -> vector<8x64xf32>
    %c0_3 = arith.constant 0 : index
    %c0_4 = arith.constant 0 : index
    %3 = vector.load %arg3[%c0_3, %c0_4] : memref<1x64xf32, #tpu.memory_space<vmem>>, vector<1x64xf32>
    %4 = vector.broadcast %3 : vector<1x64xf32> to vector<8x64xf32>
    %5 = arith.addf %2, %4 : vector<8x64xf32>
    %cst_5 = arith.constant 5.000000e-01 : f32
    %6 = vector.broadcast %cst_5 : f32 to vector<8x64xf32>
    %7 = arith.mulf %6, %5 : vector<8x64xf32>
    %cst_6 = arith.constant 0.707106769 : f32
    %8 = vector.broadcast %cst_6 : f32 to vector<8x64xf32>
    %9 = arith.mulf %5, %8 : vector<8x64xf32>
    %10 = math.erf %9 : vector<8x64xf32>
    %cst_7 = arith.constant 1.000000e+00 : f32
    %11 = vector.broadcast %cst_7 : f32 to vector<8x64xf32>
    %12 = arith.addf %11, %10 : vector<8x64xf32>
    %13 = arith.mulf %7, %12 : vector<8x64xf32>
    %14 = arith.truncf %13 : vector<8x64xf32> to vector<8x64xbf16>
    %c0_8 = arith.constant 0 : index
    %c0_9 = arith.constant 0 : index
    %15 = vector.load %arg4[%c0_8, %c0_9] : memref<64x64xbf16, #tpu.memory_space<vmem>>, vector<64x64xbf16>
    %cst_10 = arith.constant dense<0.000000e+00> : vector<8x64xf32>
    %16 = tpu.matmul %14, %15, %cst_10 {dimension_numbers = #tpu.dot_dimension_numbers<[1], [0], [0], [1], [0, 0, 1, 1], [], []>} : vector<8x64xbf16>, vector<64x64xbf16>, vector<8x64xf32> -> vector<8x64xf32>
    %c0_11 = arith.constant 0 : index
    %c0_12 = arith.constant 0 : index
    %17 = vector.load %arg5[%c0_11, %c0_12] : memref<1x64xf32, #tpu.memory_space<vmem>>, vector<1x64xf32>
    %18 = vector.broadcast %17 : vector<1x64xf32> to vector<8x64xf32>
    %19 = arith.addf %16, %18 : vector<8x64xf32>
    %cst_13 = arith.constant 5.000000e-01 : f32
    %20 = vector.broadcast %cst_13 : f32 to vector<8x64xf32>
    %21 = arith.mulf %20, %19 : vector<8x64xf32>
    %cst_14 = arith.constant 0.707106769 : f32
    %22 = vector.broadcast %cst_14 : f32 to vector<8x64xf32>
    %23 = arith.mulf %19, %22 : vector<8x64xf32>
    %24 = math.erf %23 : vector<8x64xf32>
    %cst_15 = arith.constant 1.000000e+00 : f32
    %25 = vector.broadcast %cst_15 : f32 to vector<8x64xf32>
    %26 = arith.addf %25, %24 : vector<8x64xf32>
    %27 = arith.mulf %21, %26 : vector<8x64xf32>
    %28 = arith.truncf %27 : vector<8x64xf32> to vector<8x64xbf16>
    %c0_16 = arith.constant 0 : index
    %c0_17 = arith.constant 0 : index
    %29 = vector.load %arg6[%c0_16, %c0_17] : memref<64x64xbf16, #tpu.memory_space<vmem>>, vector<64x64xbf16>
    %cst_18 = arith.constant dense<0.000000e+00> : vector<8x64xf32>
    %30 = tpu.matmul %28, %29, %cst_18 {dimension_numbers = #tpu.dot_dimension_numbers<[1], [0], [0], [1], [0, 0, 1, 1], [], []>} : vector<8x64xbf16>, vector<64x64xbf16>, vector<8x64xf32> -> vector<8x64xf32>
    %c0_19 = arith.constant 0 : index
    %c0_20 = arith.constant 0 : index
    %31 = vector.load %arg7[%c0_19, %c0_20] : memref<1x64xf32, #tpu.memory_space<vmem>>, vector<1x64xf32>
    %32 = vector.broadcast %31 : vector<1x64xf32> to vector<8x64xf32>
    %33 = arith.addf %30, %32 : vector<8x64xf32>
    %cst_21 = arith.constant 5.000000e-01 : f32
    %34 = vector.broadcast %cst_21 : f32 to vector<8x64xf32>
    %35 = arith.mulf %34, %33 : vector<8x64xf32>
    %cst_22 = arith.constant 0.707106769 : f32
    %36 = vector.broadcast %cst_22 : f32 to vector<8x64xf32>
    %37 = arith.mulf %33, %36 : vector<8x64xf32>
    %38 = math.erf %37 : vector<8x64xf32>
    %cst_23 = arith.constant 1.000000e+00 : f32
    %39 = vector.broadcast %cst_23 : f32 to vector<8x64xf32>
    %40 = arith.addf %39, %38 : vector<8x64xf32>
    %41 = arith.mulf %35, %40 : vector<8x64xf32>
    %42 = arith.truncf %41 : vector<8x64xf32> to vector<8x64xbf16>
    %c0_24 = arith.constant 0 : index
    %c0_25 = arith.constant 0 : index
    %43 = vector.load %arg8[%c0_24, %c0_25] : memref<64x64xbf16, #tpu.memory_space<vmem>>, vector<64x64xbf16>
    %cst_26 = arith.constant dense<0.000000e+00> : vector<8x64xf32>
    %44 = tpu.matmul %42, %43, %cst_26 {dimension_numbers = #tpu.dot_dimension_numbers<[1], [0], [0], [1], [0, 0, 1, 1], [], []>} : vector<8x64xbf16>, vector<64x64xbf16>, vector<8x64xf32> -> vector<8x64xf32>
    %c0_27 = arith.constant 0 : index
    %c0_28 = arith.constant 0 : index
    %45 = vector.load %arg9[%c0_27, %c0_28] : memref<1x64xf32, #tpu.memory_space<vmem>>, vector<1x64xf32>
    %46 = vector.broadcast %45 : vector<1x64xf32> to vector<8x64xf32>
    %47 = arith.addf %44, %46 : vector<8x64xf32>
    %cst_29 = arith.constant 5.000000e-01 : f32
    %48 = vector.broadcast %cst_29 : f32 to vector<8x64xf32>
    %49 = arith.mulf %48, %47 : vector<8x64xf32>
    %cst_30 = arith.constant 0.707106769 : f32
    %50 = vector.broadcast %cst_30 : f32 to vector<8x64xf32>
    %51 = arith.mulf %47, %50 : vector<8x64xf32>
    %52 = math.erf %51 : vector<8x64xf32>
    %cst_31 = arith.constant 1.000000e+00 : f32
    %53 = vector.broadcast %cst_31 : f32 to vector<8x64xf32>
    %54 = arith.addf %53, %52 : vector<8x64xf32>
    %55 = arith.mulf %49, %54 : vector<8x64xf32>
    %56 = arith.truncf %55 : vector<8x64xf32> to vector<8x64xbf16>
    %c0_32 = arith.constant 0 : index
    %c0_33 = arith.constant 0 : index
    %57 = vector.load %arg10[%c0_32, %c0_33] : memref<64x36xbf16, #tpu.memory_space<vmem>>, vector<64x36xbf16>
    %cst_34 = arith.constant dense<0.000000e+00> : vector<8x36xf32>
    %58 = tpu.matmul %56, %57, %cst_34 {dimension_numbers = #tpu.dot_dimension_numbers<[1], [0], [0], [1], [0, 0, 1, 1], [], []>} : vector<8x64xbf16>, vector<64x36xbf16>, vector<8x36xf32> -> vector<8x36xf32>
    %c0_35 = arith.constant 0 : index
    %c0_36 = arith.constant 0 : index
    %59 = vector.load %arg11[%c0_35, %c0_36] : memref<1x36xf32, #tpu.memory_space<vmem>>, vector<1x36xf32>
    %60 = vector.broadcast %59 : vector<1x36xf32> to vector<8x36xf32>
    %61 = arith.addf %58, %60 : vector<8x36xf32>
    %62 = vector.extract_strided_slice %0 {offsets = [0, 0], sizes = [8, 9], strides = [1, 1]} : vector<8x128xbf16> to vector<8x9xbf16>
    %63 = arith.extf %62 : vector<8x9xbf16> to vector<8x9xf32>
    %64 = vector.extract_strided_slice %61 {offsets = [0, 0], sizes = [8, 9], strides = [1, 1]} : vector<8x36xf32> to vector<8x9xf32>
    %65 = arith.addf %63, %64 : vector<8x9xf32>
    %66 = vector.extract_strided_slice %0 {offsets = [0, 71], sizes = [8, 27], strides = [1, 1]} : vector<8x128xbf16> to vector<8x27xbf16>
    %67 = arith.extf %66 : vector<8x27xbf16> to vector<8x27xf32>
    %68 = vector.extract_strided_slice %67 {offsets = [0, 0], sizes = [8, 9], strides = [1, 1]} : vector<8x27xf32> to vector<8x9xf32>
    %69 = vector.extract_strided_slice %61 {offsets = [0, 9], sizes = [8, 9], strides = [1, 1]} : vector<8x36xf32> to vector<8x9xf32>
    %70 = arith.mulf %68, %69 : vector<8x9xf32>
    %71 = vector.extract_strided_slice %67 {offsets = [0, 9], sizes = [8, 9], strides = [1, 1]} : vector<8x27xf32> to vector<8x9xf32>
    %72 = vector.extract_strided_slice %61 {offsets = [0, 18], sizes = [8, 9], strides = [1, 1]} : vector<8x36xf32> to vector<8x9xf32>
    %73 = arith.mulf %71, %72 : vector<8x9xf32>
    %74 = arith.addf %70, %73 : vector<8x9xf32>
    %75 = vector.extract_strided_slice %67 {offsets = [0, 18], sizes = [8, 9], strides = [1, 1]} : vector<8x27xf32> to vector<8x9xf32>
    %76 = vector.extract_strided_slice %61 {offsets = [0, 27], sizes = [8, 9], strides = [1, 1]} : vector<8x36xf32> to vector<8x9xf32>
    %77 = arith.mulf %75, %76 : vector<8x9xf32>
    %78 = arith.addf %74, %77 : vector<8x9xf32>
    %c0_37 = arith.constant 0 : index
    %c0_38 = arith.constant 0 : index
    %79 = vector.load %arg12[%c0_37, %c0_38] : memref<8x18xf32, #tpu.memory_space<vmem>>, vector<8x9xf32>
    tpu.vector_store %arg12[%c0_37, %c0_38], %65 {strides = array<i32>} : memref<8x18xf32, #tpu.memory_space<vmem>>, vector<8x9xf32>,
    %c0_39 = arith.constant 0 : index
    %c9 = arith.constant 9 : index
    %80 = vector.load %arg12[%c0_39, %c9] : memref<8x18xf32, #tpu.memory_space<vmem>>, vector<8x9xf32>
    tpu.vector_store %arg12[%c0_39, %c9], %78 {strides = array<i32>} : memref<8x18xf32, #tpu.memory_space<vmem>>, vector<8x9xf32>,
    return
  }
  func.func @transform_0(%arg0: i32) -> (i32, i32) {
    %c0_i32 = arith.constant 0 : i32
    %c0_i32_0 = arith.constant 0 : i32
    return %arg0, %c0_i32 : i32, i32
  }
  func.func @transform_1(%arg0: i32) -> (i32, i32) {
    %c0_i32 = arith.constant 0 : i32
    %c0_i32_0 = arith.constant 0 : i32
    %c0_i32_1 = arith.constant 0 : i32
    return %c0_i32, %c0_i32_0 : i32, i32
  }
  func.func @transform_2(%arg0: i32) -> (i32, i32) {
    %c0_i32 = arith.constant 0 : i32
    %c0_i32_0 = arith.constant 0 : i32
    %c0_i32_1 = arith.constant 0 : i32
    return %c0_i32, %c0_i32_0 : i32, i32
  }
  func.func @transform_3(%arg0: i32) -> (i32, i32) {
    %c0_i32 = arith.constant 0 : i32
    %c0_i32_0 = arith.constant 0 : i32
    %c0_i32_1 = arith.constant 0 : i32
    return %c0_i32, %c0_i32_0 : i32, i32
  }
  func.func @transform_4(%arg0: i32) -> (i32, i32) {
    %c0_i32 = arith.constant 0 : i32
    %c0_i32_0 = arith.constant 0 : i32
    %c0_i32_1 = arith.constant 0 : i32
    return %c0_i32, %c0_i32_0 : i32, i32
  }
  func.func @transform_5(%arg0: i32) -> (i32, i32) {
    %c0_i32 = arith.constant 0 : i32
    %c0_i32_0 = arith.constant 0 : i32
    %c0_i32_1 = arith.constant 0 : i32
    return %c0_i32, %c0_i32_0 : i32, i32
  }
  func.func @transform_6(%arg0: i32) -> (i32, i32) {
    %c0_i32 = arith.constant 0 : i32
    %c0_i32_0 = arith.constant 0 : i32
    %c0_i32_1 = arith.constant 0 : i32
    return %c0_i32, %c0_i32_0 : i32, i32
  }
  func.func @transform_7(%arg0: i32) -> (i32, i32) {
    %c0_i32 = arith.constant 0 : i32
    %c0_i32_0 = arith.constant 0 : i32
    %c0_i32_1 = arith.constant 0 : i32
    return %c0_i32, %c0_i32_0 : i32, i32
  }
  func.func @transform_8(%arg0: i32) -> (i32, i32) {
    %c0_i32 = arith.constant 0 : i32
    %c0_i32_0 = arith.constant 0 : i32
    %c0_i32_1 = arith.constant 0 : i32
    return %c0_i32, %c0_i32_0 : i32, i32
  }
  func.func @transform_9(%arg0: i32) -> (i32, i32) {
    %c0_i32 = arith.constant 0 : i32
    %c0_i32_0 = arith.constant 0 : i32
    %c0_i32_1 = arith.constant 0 : i32
    return %c0_i32, %c0_i32_0 : i32, i32
  }
  func.func @transform_10(%arg0: i32) -> (i32, i32) {
    %c0_i32 = arith.constant 0 : i32
    %c0_i32_0 = arith.constant 0 : i32
    %c0_i32_1 = arith.constant 0 : i32
    return %c0_i32, %c0_i32_0 : i32, i32
  }
  func.func @transform_11(%arg0: i32) -> (i32, i32) {
    %c0_i32 = arith.constant 0 : i32
    %c0_i32_0 = arith.constant 0 : i32
    return %arg0, %c0_i32 : i32, i32
  }
}

</mosaic_0001>

<llo_original>
// kernel: tpu_custom_call.1
$region0: #{tpu_custom_call.1}
  #allocation0 [shape = 'u32[]', space=smem, size = 0x4, offset = 0x4, fixed_abs, tag = 'smem constant byte address 0x4 - core index']
  #allocation1 [shape = 'u32[72,128]{1,0:T(1,128)}', space=vmem, size = 0x9000, scoped, tag = 'internal scratch']
  %s0 = inlined_call_operand.vmem [shape: bf16[16,128], index: 0, kind: input, shape index: {}]
  %s1 = inlined_call_operand.vmem [shape: bf16[128,64], index: 1, kind: input, shape index: {}]
  %s2 = inlined_call_operand.vmem [shape: f32[1,64], index: 2, kind: input, shape index: {}]
  %s3 = inlined_call_operand.vmem [shape: bf16[64,64], index: 3, kind: input, shape index: {}]
  %s4 = inlined_call_operand.vmem [shape: f32[1,64], index: 4, kind: input, shape index: {}]
  %s5 = inlined_call_operand.vmem [shape: bf16[64,64], index: 5, kind: input, shape index: {}]
  %s6 = inlined_call_operand.vmem [shape: f32[1,64], index: 6, kind: input, shape index: {}]
  %s7 = inlined_call_operand.vmem [shape: bf16[64,64], index: 7, kind: input, shape index: {}]
  %s8 = inlined_call_operand.vmem [shape: f32[1,64], index: 8, kind: input, shape index: {}]
  %s9 = inlined_call_operand.vmem [shape: bf16[64,36], index: 9, kind: input, shape index: {}]
  %s10 = inlined_call_operand.vmem [shape: f32[1,36], index: 10, kind: input, shape index: {}]
  %s11 = inlined_call_operand.hbm [shape: f32[16,18], index: 11, kind: output, shape index: {}]
  %s12 = sld [smem:[#allocation0]]
  $region77: #{tpu_custom_call.1} parent=0
    _
  %s14 = ssub.s32 1, %s12
  %s15 = scalar_select 0, %s14, %s12
  $region1: #{tpu_custom_call.1} parent=0
    #allocation2 [shape = 'u8[8192]{0}', space=vmem, size = 0x2000, scoped, tag = 'output window, operand 0']
    #allocation3 [shape = 's32[2]{0}', space=sflag, size = 0x8, scoped, tag = 'scoped memory for tpu_custom_call.1']
    %16 = vsyncpa [#allocation3], 0
    %s17 = scalar_lea.sflag [#allocation3], 1
    %18 = vsyncpa %s17, 0
    loop: start=0, step=1, limit=4
    $region2: #{tpu_custom_call.1} parent=1 // loop_pre_header
      _
    $region3: #{tpu_custom_call.1} parent=1 // loop_header
      %s20 = sphi 0, %s24
      %p21 = scmp.ge.s32.totalorder %s20, 4
      %s30 = sphi 0, %s32
      %s33 = sphi 0, %s30
      %s34 = sphi 0, %s33
      %s50 = sphi 0, %s34
      %s54 = sphi 0, %s54
      %s56 = sphi 0, %s54
      %s57 = sphi 0, %s56
      %s71 = sphi 0, %s57
      %s75 = sphi 0, %s75
      %s77 = sphi 0, %s75
      %s78 = sphi 0, %s77
      %s92 = sphi 0, %s78
      %s96 = sphi 0, %s96
      %s98 = sphi 0, %s96
      %s99 = sphi 0, %s98
      %s113 = sphi 0, %s99
      %s117 = sphi 0, %s117
      %s119 = sphi 0, %s117
      %s120 = sphi 0, %s119
      %s134 = sphi 0, %s120
      %s138 = sphi 0, %s138
      %s140 = sphi 0, %s138
      %s141 = sphi 0, %s140
      %s155 = sphi 0, %s141
      %s159 = sphi 0, %s159
      %s161 = sphi 0, %s159
      %s162 = sphi 0, %s161
      %s176 = sphi 0, %s162
      %s180 = sphi 0, %s180
      %s182 = sphi 0, %s180
      %s183 = sphi 0, %s182
      %s197 = sphi 0, %s183
      %s201 = sphi 0, %s201
      %s203 = sphi 0, %s201
      %s204 = sphi 0, %s203
      %s218 = sphi 0, %s204
      %s222 = sphi 0, %s222
      %s224 = sphi 0, %s222
      %s225 = sphi 0, %s224
      %s239 = sphi 0, %s225
      %s243 = sphi 0, %s243
      %s245 = sphi 0, %s243
      %s246 = sphi 0, %s245
      %s260 = sphi 0, %s246
      %s266 = sphi 0, %s268
      %s269 = sphi 0, %s266
      %s270 = sphi 0, %s269
      %s286 = sphi 0, %s270
    $region4: #{tpu_custom_call.1} parent=1 // loop_header_branch
      %23 = sbr.rel (%p21) target = $region8
    $region5: #{tpu_custom_call.1} parent=1 // loop_body
      %s25 = ssub.s32 %s20, 1
      %s26 = ssub.s32 %s20, 2
      %s27 = sadd.s32 %s20, 1
      %s28 = ssub.s32 %s20, %s27
      %p29 = scmp.eq.s32.totalorder %s28, 0
      %s31 = sadd.s32 %s30, 1
      %s32 = scalar_select %p29, %s30, %s31
      %p35 = pneg %p29
      %p36 = scmp.eq.s32.totalorder %s20, 1
      %p37 = por %p35, %p36
      %p38 = scmp.ne.s32.totalorder %s30, %s33
      %p39 = scmp.eq.s32.totalorder %s20, 0
      %p40 = por %p38, %p39
      %p41 = scmp.ne.s32.totalorder %s30, %s33
      %p42 = scmp.eq.s32.totalorder %s25, 1
      %p43 = por %p41, %p42
      %p44 = scmp.ne.s32.totalorder %s33, %s34
      %p45 = scmp.eq.s32.totalorder %s25, 0
      %p46 = por %p44, %p45
      %p47 = scmp.ne.s32.totalorder %s33, %s34
      %p48 = scmp.eq.s32.totalorder %s26, 1
      %p49 = por %p47, %p48
      %p51 = scmp.ne.s32.totalorder %s34, %s50
      %p52 = scmp.eq.s32.totalorder %s26, 0
      %p53 = por %p51, %p52
      %s55 = sadd.s32 %s54, 1
      %p58 = scmp.eq.s32.totalorder %s20, 1
      %p59 = scmp.ne.s32.totalorder %s54, %s56
      %p60 = scmp.eq.s32.totalorder %s20, 0
      %p61 = por %p59, %p60
      %p62 = scmp.ne.s32.totalorder %s54, %s56
      %p63 = scmp.eq.s32.totalorder %s25, 1
      %p64 = por %p62, %p63
      %p65 = scmp.ne.s32.totalorder %s56, %s57
      %p66 = scmp.eq.s32.totalorder %s25, 0
      %p67 = por %p65, %p66
      %p68 = scmp.ne.s32.totalorder %s56, %s57
      %p69 = scmp.eq.s32.totalorder %s26, 1
      %p70 = por %p68, %p69
      %p72 = scmp.ne.s32.totalorder %s57, %s71
      %p73 = scmp.eq.s32.totalorder %s26, 0
      %p74 = por %p72, %p73
      %s76 = sadd.s32 %s75, 1
      %p79 = scmp.eq.s32.totalorder %s20, 1
      %p80 = scmp.ne.s32.totalorder %s75, %s77
      %p81 = scmp.eq.s32.totalorder %s20, 0
      %p82 = por %p80, %p81
      %p83 = scmp.ne.s32.totalorder %s75, %s77
      %p84 = scmp.eq.s32.totalorder %s25, 1
      %p85 = por %p83, %p84
      %p86 = scmp.ne.s32.totalorder %s77, %s78
      %p87 = scmp.eq.s32.totalorder %s25, 0
      %p88 = por %p86, %p87
      %p89 = scmp.ne.s32.totalorder %s77, %s78
      %p90 = scmp.eq.s32.totalorder %s26, 1
      %p91 = por %p89, %p90
      %p93 = scmp.ne.s32.totalorder %s78, %s92
      %p94 = scmp.eq.s32.totalorder %s26, 0
      %p95 = por %p93, %p94
      %s97 = sadd.s32 %s96, 1
      %p100 = scmp.eq.s32.totalorder %s20, 1
      %p101 = scmp.ne.s32.totalorder %s96, %s98
      %p102 = scmp.eq.s32.totalorder %s20, 0
      %p103 = por %p101, %p102
      %p104 = scmp.ne.s32.totalorder %s96, %s98
      %p105 = scmp.eq.s32.totalorder %s25, 1
      %p106 = por %p104, %p105
      %p107 = scmp.ne.s32.totalorder %s98, %s99
      %p108 = scmp.eq.s32.totalorder %s25, 0
      %p109 = por %p107, %p108
      %p110 = scmp.ne.s32.totalorder %s98, %s99
      %p111 = scmp.eq.s32.totalorder %s26, 1
      %p112 = por %p110, %p111
      %p114 = scmp.ne.s32.totalorder %s99, %s113
      %p115 = scmp.eq.s32.totalorder %s26, 0
      %p116 = por %p114, %p115
      %s118 = sadd.s32 %s117, 1
      %p121 = scmp.eq.s32.totalorder %s20, 1
      %p122 = scmp.ne.s32.totalorder %s117, %s119
      %p123 = scmp.eq.s32.totalorder %s20, 0
      %p124 = por %p122, %p123
      %p125 = scmp.ne.s32.totalorder %s117, %s119
      %p126 = scmp.eq.s32.totalorder %s25, 1
      %p127 = por %p125, %p126
      %p128 = scmp.ne.s32.totalorder %s119, %s120
      %p129 = scmp.eq.s32.totalorder %s25, 0
      %p130 = por %p128, %p129
      %p131 = scmp.ne.s32.totalorder %s119, %s120
      %p132 = scmp.eq.s32.totalorder %s26, 1
      %p133 = por %p131, %p132
      %p135 = scmp.ne.s32.totalorder %s120, %s134
      %p136 = scmp.eq.s32.totalorder %s26, 0
      %p137 = por %p135, %p136
      %s139 = sadd.s32 %s138, 1
      %p142 = scmp.eq.s32.totalorder %s20, 1
      %p143 = scmp.ne.s32.totalorder %s138, %s140
      %p144 = scmp.eq.s32.totalorder %s20, 0
      %p145 = por %p143, %p144
      %p146 = scmp.ne.s32.totalorder %s138, %s140
      %p147 = scmp.eq.s32.totalorder %s25, 1
      %p148 = por %p146, %p147
      %p149 = scmp.ne.s32.totalorder %s140, %s141
      %p150 = scmp.eq.s32.totalorder %s25, 0
      %p151 = por %p149, %p150
      %p152 = scmp.ne.s32.totalorder %s140, %s141
      %p153 = scmp.eq.s32.totalorder %s26, 1
      %p154 = por %p152, %p153
      %p156 = scmp.ne.s32.totalorder %s141, %s155
      %p157 = scmp.eq.s32.totalorder %s26, 0
      %p158 = por %p156, %p157
      %s160 = sadd.s32 %s159, 1
      %p163 = scmp.eq.s32.totalorder %s20, 1
      %p164 = scmp.ne.s32.totalorder %s159, %s161
      %p165 = scmp.eq.s32.totalorder %s20, 0
      %p166 = por %p164, %p165
      %p167 = scmp.ne.s32.totalorder %s159, %s161
      %p168 = scmp.eq.s32.totalorder %s25, 1
      %p169 = por %p167, %p168
      %p170 = scmp.ne.s32.totalorder %s161, %s162
      %p171 = scmp.eq.s32.totalorder %s25, 0
      %p172 = por %p170, %p171
      %p173 = scmp.ne.s32.totalorder %s161, %s162
      %p174 = scmp.eq.s32.totalorder %s26, 1
      %p175 = por %p173, %p174
      %p177 = scmp.ne.s32.totalorder %s162, %s176
      %p178 = scmp.eq.s32.totalorder %s26, 0
      %p179 = por %p177, %p178
      %s181 = sadd.s32 %s180, 1
      %p184 = scmp.eq.s32.totalorder %s20, 1
      %p185 = scmp.ne.s32.totalorder %s180, %s182
      %p186 = scmp.eq.s32.totalorder %s20, 0
      %p187 = por %p185, %p186
      %p188 = scmp.ne.s32.totalorder %s180, %s182
      %p189 = scmp.eq.s32.totalorder %s25, 1
      %p190 = por %p188, %p189
      %p191 = scmp.ne.s32.totalorder %s182, %s183
      %p192 = scmp.eq.s32.totalorder %s25, 0
      %p193 = por %p191, %p192
      %p194 = scmp.ne.s32.totalorder %s182, %s183
      %p195 = scmp.eq.s32.totalorder %s26, 1
      %p196 = por %p194, %p195
      %p198 = scmp.ne.s32.totalorder %s183, %s197
      %p199 = scmp.eq.s32.totalorder %s26, 0
      %p200 = por %p198, %p199
      %s202 = sadd.s32 %s201, 1
      %p205 = scmp.eq.s32.totalorder %s20, 1
      %p206 = scmp.ne.s32.totalorder %s201, %s203
      %p207 = scmp.eq.s32.totalorder %s20, 0
      %p208 = por %p206, %p207
      %p209 = scmp.ne.s32.totalorder %s201, %s203
      %p210 = scmp.eq.s32.totalorder %s25, 1
      %p211 = por %p209, %p210
      %p212 = scmp.ne.s32.totalorder %s203, %s204
      %p213 = scmp.eq.s32.totalorder %s25, 0
      %p214 = por %p212, %p213
      %p215 = scmp.ne.s32.totalorder %s203, %s204
      %p216 = scmp.eq.s32.totalorder %s26, 1
      %p217 = por %p215, %p216
      %p219 = scmp.ne.s32.totalorder %s204, %s218
      %p220 = scmp.eq.s32.totalorder %s26, 0
      %p221 = por %p219, %p220
      %s223 = sadd.s32 %s222, 1
      %p226 = scmp.eq.s32.totalorder %s20, 1
      %p227 = scmp.ne.s32.totalorder %s222, %s224
      %p228 = scmp.eq.s32.totalorder %s20, 0
      %p229 = por %p227, %p228
      %p230 = scmp.ne.s32.totalorder %s222, %s224
      %p231 = scmp.eq.s32.totalorder %s25, 1
      %p232 = por %p230, %p231
      %p233 = scmp.ne.s32.totalorder %s224, %s225
      %p234 = scmp.eq.s32.totalorder %s25, 0
      %p235 = por %p233, %p234
      %p236 = scmp.ne.s32.totalorder %s224, %s225
      %p237 = scmp.eq.s32.totalorder %s26, 1
      %p238 = por %p236, %p237
      %p240 = scmp.ne.s32.totalorder %s225, %s239
      %p241 = scmp.eq.s32.totalorder %s26, 0
      %p242 = por %p240, %p241
      %s244 = sadd.s32 %s243, 1
      %p247 = scmp.eq.s32.totalorder %s20, 1
      %p248 = scmp.ne.s32.totalorder %s243, %s245
      %p249 = scmp.eq.s32.totalorder %s20, 0
      %p250 = por %p248, %p249
      %p251 = scmp.ne.s32.totalorder %s243, %s245
      %p252 = scmp.eq.s32.totalorder %s25, 1
      %p253 = por %p251, %p252
      %p254 = scmp.ne.s32.totalorder %s245, %s246
      %p255 = scmp.eq.s32.totalorder %s25, 0
      %p256 = por %p254, %p255
      %p257 = scmp.ne.s32.totalorder %s245, %s246
      %p258 = scmp.eq.s32.totalorder %s26, 1
      %p259 = por %p257, %p258
      %p261 = scmp.ne.s32.totalorder %s246, %s260
      %p262 = scmp.eq.s32.totalorder %s26, 0
      %p263 = por %p261, %p262
      %s264 = ssub.s32 %s20, %s27
      %p265 = scmp.eq.s32.totalorder %s264, 0
      %s267 = sadd.s32 %s266, 1
      %s268 = scalar_select %p265, %s266, %s267
      %p271 = pneg %p265
      %p272 = scmp.eq.s32.totalorder %s20, 1
      %p273 = por %p271, %p272
      %p274 = scmp.ne.s32.totalorder %s266, %s269
      %p275 = scmp.eq.s32.totalorder %s20, 0
      %p276 = por %p274, %p275
      %p277 = scmp.ne.s32.totalorder %s266, %s269
      %p278 = scmp.eq.s32.totalorder %s25, 1
      %p279 = por %p277, %p278
      %p280 = scmp.ne.s32.totalorder %s269, %s270
      %p281 = scmp.eq.s32.totalorder %s25, 0
      %p282 = por %p280, %p281
      %p283 = scmp.ne.s32.totalorder %s269, %s270
      %p284 = scmp.eq.s32.totalorder %s26, 1
      %p285 = por %p283, %p284
      %p287 = scmp.ne.s32.totalorder %s270, %s286
      %p288 = scmp.eq.s32.totalorder %s26, 0
      %p289 = por %p287, %p288
      %p290 = scmp.le.s32.totalorder 1, %s20
      %p291 = scmp.lt.s32.totalorder %s20, 3
      %p292 = pnand %p290, %p291
      %p293 = pneg %p292
      // Predicated region
      $region9: #{tpu_custom_call.1} parent=5 // pred_check
        _
      $region10: #{tpu_custom_call.1} parent=5 // pred_check_branch
        %295 = sbr.rel (%p292) target = $region12
      $region11: #{tpu_custom_call.1} parent=5 // pred_region
        %s296 = ssub.s32 %s20, 1
        // Predicated region
        $region13: #{tpu_custom_call.1} parent=11 // pred_check
          %p297 = pneg %p67
        $region14: #{tpu_custom_call.1} parent=11 // pred_check_branch
          %299 = sbr.rel (%p297) target = $region16
        $region15: #{tpu_custom_call.1} parent=11 // pred_region
          _
        $region16: #{tpu_custom_call.1} parent=11 // pred_fallthru
          _
        // Predicated region
        $region17: #{tpu_custom_call.1} parent=11 // pred_check
          %p300 = pneg %p88
        $region18: #{tpu_custom_call.1} parent=11 // pred_check_branch
          %302 = sbr.rel (%p300) target = $region20
        $region19: #{tpu_custom_call.1} parent=11 // pred_region
          _
        $region20: #{tpu_custom_call.1} parent=11 // pred_fallthru
          _
        // Predicated region
        $region21: #{tpu_custom_call.1} parent=11 // pred_check
          %p303 = pneg %p109
        $region22: #{tpu_custom_call.1} parent=11 // pred_check_branch
          %305 = sbr.rel (%p303) target = $region24
        $region23: #{tpu_custom_call.1} parent=11 // pred_region
          _
        $region24: #{tpu_custom_call.1} parent=11 // pred_fallthru
          _
        // Predicated region
        $region25: #{tpu_custom_call.1} parent=11 // pred_check
          %p306 = pneg %p130
        $region26: #{tpu_custom_call.1} parent=11 // pred_check_branch
          %308 = sbr.rel (%p306) target = $region28
        $region27: #{tpu_custom_call.1} parent=11 // pred_region
          _
        $region28: #{tpu_custom_call.1} parent=11 // pred_fallthru
          _
        // Predicated region
        $region29: #{tpu_custom_call.1} parent=11 // pred_check
          %p309 = pneg %p151
        $region30: #{tpu_custom_call.1} parent=11 // pred_check_branch
          %311 = sbr.rel (%p309) target = $region32
        $region31: #{tpu_custom_call.1} parent=11 // pred_region
          _
        $region32: #{tpu_custom_call.1} parent=11 // pred_fallthru
          _
        // Predicated region
        $region33: #{tpu_custom_call.1} parent=11 // pred_check
          %p312 = pneg %p172
        $region34: #{tpu_custom_call.1} parent=11 // pred_check_branch
          %314 = sbr.rel (%p312) target = $region36
        $region35: #{tpu_custom_call.1} parent=11 // pred_region
          _
        $region36: #{tpu_custom_call.1} parent=11 // pred_fallthru
          _
        // Predicated region
        $region37: #{tpu_custom_call.1} parent=11 // pred_check
          %p315 = pneg %p193
        $region38: #{tpu_custom_call.1} parent=11 // pred_check_branch
          %317 = sbr.rel (%p315) target = $region40
        $region39: #{tpu_custom_call.1} parent=11 // pred_region
          _
        $region40: #{tpu_custom_call.1} parent=11 // pred_fallthru
          _
        // Predicated region
        $region41: #{tpu_custom_call.1} parent=11 // pred_check
          %p318 = pneg %p214
        $region42: #{tpu_custom_call.1} parent=11 // pred_check_branch
          %320 = sbr.rel (%p318) target = $region44
        $region43: #{tpu_custom_call.1} parent=11 // pred_region
          _
        $region44: #{tpu_custom_call.1} parent=11 // pred_fallthru
          _
        // Predicated region
        $region45: #{tpu_custom_call.1} parent=11 // pred_check
          %p321 = pneg %p235
        $region46: #{tpu_custom_call.1} parent=11 // pred_check_branch
          %323 = sbr.rel (%p321) target = $region48
        $region47: #{tpu_custom_call.1} parent=11 // pred_region
          _
        $region48: #{tpu_custom_call.1} parent=11 // pred_fallthru
          _
        // Predicated region
        $region49: #{tpu_custom_call.1} parent=11 // pred_check
          %p324 = pneg %p256
        $region50: #{tpu_custom_call.1} parent=11 // pred_check_branch
          %326 = sbr.rel (%p324) target = $region52
        $region51: #{tpu_custom_call.1} parent=11 // pred_region
          _
        $region52: #{tpu_custom_call.1} parent=11 // pred_fallthru
          _
      $region12: #{tpu_custom_call.1} parent=5 // pred_fallthru
        _
      %p327 = scmp.lt.s32.totalorder %s20, 2
      // Predicated region
      $region53: #{tpu_custom_call.1} parent=5 // pred_check
        %p328 = pneg %p327
      $region54: #{tpu_custom_call.1} parent=5 // pred_check_branch
        %330 = sbr.rel (%p328) target = $region56
      $region55: #{tpu_custom_call.1} parent=5 // pred_region
        // Predicated region
        $region57: #{tpu_custom_call.1} parent=55 // pred_check
          %p331 = pneg %p40
        $region58: #{tpu_custom_call.1} parent=55 // pred_check_branch
          %333 = sbr.rel (%p331) target = $region60
        $region59: #{tpu_custom_call.1} parent=55 // pred_region
          %p334 = scmp.lt.s32.totalorder %s20, 1
          %s335 = scalar_select %p334, %s20, 1
          %s336 = smul.addr %s335, 4
          %s337 = scalar_lea.vmem %s0, %s336
        $region60: #{tpu_custom_call.1} parent=55 // pred_fallthru
          _
      $region56: #{tpu_custom_call.1} parent=5 // pred_fallthru
        _
      %p338 = scmp.le.s32.totalorder 1, %s20
      %p339 = scmp.lt.s32.totalorder %s20, 3
      %p340 = pnand %p338, %p339
      %p341 = pneg %p340
      // Predicated region
      $region61: #{tpu_custom_call.1} parent=5 // pred_check
        _
      $region62: #{tpu_custom_call.1} parent=5 // pred_check_branch
        %343 = sbr.rel (%p340) target = $region64
      $region63: #{tpu_custom_call.1} parent=5 // pred_region
        %s344 = ssub.s32 %s20, 1
        %p345 = scmp.lt.s32.totalorder %s25, 1
        %s346 = scalar_select %p345, %s25, 1
        %s347 = smul.addr %s346, 4
        %s348 = scalar_lea.vmem %s0, %s347
        %p349 = pneg %p46
        %p350 = pneg %p43
        %p351 = pneg %p67
        %p352 = pneg %p64
        %p353 = pneg %p88
        %p354 = pneg %p85
        %p355 = pneg %p109
        %p356 = pneg %p106
        %p357 = pneg %p130
        %p358 = pneg %p127
        %p359 = pneg %p151
        %p360 = pneg %p148
        %p361 = pneg %p172
        %p362 = pneg %p169
        %p363 = pneg %p193
        %p364 = pneg %p190
        %p365 = pneg %p214
        %p366 = pneg %p211
        %p367 = pneg %p235
        %p368 = pneg %p232
        %p369 = pneg %p256
        %p370 = pneg %p253
        %p371 = pneg %p282
        %p372 = pneg %p279
        %s373 = sand.u32 %s269, 1
        %s374 = scalar_lea.sflag [#allocation3], %s373
        %s375 = sand.u32 %s269, 1
        %s376 = smul.addr %s375, 8
        %s377 = scalar_lea.vmem [#allocation2], %s376
        %p378 = scmp.lt.s32.totalorder %s25, 1
        %s379 = scalar_select %p378, %s25, 1
        %s380 = smul.addr %s379, 4
        %s381 = scalar_lea.vmem %s0, %s380
        %v383 = vld [vmem:[%s381] sm:$0xf]
        %v384 = vld [vmem:[%s1] sm:$0xf]
        %v385 = vld [vmem:[%s1 + $0x4] sm:$0xf]
        %v386 = vld [vmem:[%s1 + $0x8] sm:$0xf]
        %v387 = vld [vmem:[%s1 + $0xc] sm:$0xf]
        %v388 = vld [vmem:[%s1 + $0x10] sm:$0xf]
        %v389 = vld [vmem:[%s1 + $0x14] sm:$0xf]
        %v390 = vld [vmem:[%s1 + $0x18] sm:$0xf]
        %v391 = vld [vmem:[%s1 + $0x1c] sm:$0xf]
        %v392 = vld [vmem:[%s1 + $0x20] sm:$0xf]
        %v393 = vld [vmem:[%s1 + $0x24] sm:$0xf]
        %v394 = vld [vmem:[%s1 + $0x28] sm:$0xf]
        %v395 = vld [vmem:[%s1 + $0x2c] sm:$0xf]
        %v396 = vld [vmem:[%s1 + $0x30] sm:$0xf]
        %v397 = vld [vmem:[%s1 + $0x34] sm:$0xf]
        %v398 = vld [vmem:[%s1 + $0x38] sm:$0xf]
        %v399 = vld [vmem:[%s1 + $0x3c] sm:$0xf]
        %v400 = vld [vmem:[%s2] sm:$0x1]
        %v402 = vperm.slane %v400, 0
        %v420 = vunpack.c.l.b16 %v384
        %v421 = vunpack.c.l.b16 %v385
        %v422 = vunpack.c.l.b16 %v386
        %v423 = vunpack.c.l.b16 %v387
        %v424 = vunpack.c.l.b16 %v388
        %v425 = vunpack.c.l.b16 %v389
        %v426 = vunpack.c.l.b16 %v390
        %v427 = vunpack.c.l.b16 %v391
        %v428 = vunpack.c.l.b16 %v392
        %v429 = vunpack.c.l.b16 %v393
        %v430 = vunpack.c.l.b16 %v394
        %v431 = vunpack.c.l.b16 %v395
        %v432 = vunpack.c.l.b16 %v396
        %v433 = vunpack.c.l.b16 %v397
        %v434 = vunpack.c.l.b16 %v398
        %v435 = vunpack.c.l.b16 %v399
        %v436 = vpack.c.b16 %v421, %v420
        %v437 = vpack.c.b16 %v423, %v422
        %v438 = vpack.c.b16 %v425, %v424
        %v439 = vpack.c.b16 %v427, %v426
        %v440 = vpack.c.b16 %v429, %v428
        %v441 = vpack.c.b16 %v431, %v430
        %v442 = vpack.c.b16 %v433, %v432
        %v443 = vpack.c.b16 %v435, %v434
        %452 = vmatpush.bf16.msra.mxu0 %v443
        %453 = vmatpush.bf16.msra.mxu0 %v442
        %454 = vmatpush.bf16.msra.mxu0 %v441
        %455 = vmatpush.bf16.msra.mxu0 %v440
        %456 = vmatpush.bf16.msra.mxu0 %v439
        %457 = vmatpush.bf16.msra.mxu0 %v438
        %458 = vmatpush.bf16.msra.mxu0 %v437
        %459 = vmatpush.bf16.msra.mxu0 %v436
        %460 = vmatmul.bf16.gmra.mxu0 %v383
        %v461 = vpop.f32.mrf.mxu0
        %v462 = vadd.f32 %v402, %v461
        %v463 = vpop.f32.mrf.mxu0
        %464 = vdwg.mxu0
        %v465 = vmul.f32 %v462, 0.5
        %v466 = vmul.f32 %v462, 0.70710677
        %v467 = vmul.f32 %v466, %v466
        %v468 = vmin.f32 16.0, %v467
        %v469 = vmul.f32 %v468, 2.1237322e-06
        %v470 = vadd.f32 %v469, 0.00028619796
        %v471 = vmul.f32 %v468, %v470
        %v472 = vadd.f32 %v471, 0.0036580483
        %v473 = vmul.f32 %v468, %v472
        %v474 = vadd.f32 %v473, 0.05243302
        %v475 = vmul.f32 %v468, %v474
        %v476 = vadd.f32 %v475, 0.18741608
        %v477 = vmul.f32 %v468, %v476
        %v478 = vadd.f32 %v477, 1.1283791
        %v479 = vmul.f32 %v466, %v478
        %v480 = vmul.f32 %v468, 3.8918573e-05
        %v481 = vadd.f32 %v480, 0.001143296
        %v482 = vmul.f32 %v468, %v481
        %v483 = vadd.f32 %v482, 0.014752088
        %v484 = vmul.f32 %v468, %v483
        %v485 = vadd.f32 %v484, 0.112945676
        %v486 = vmul.f32 %v468, %v485
        %v487 = vadd.f32 %v486, 0.4994258
        %v488 = vmul.f32 %v468, %v487
        %v489 = vadd.f32 %v488, 1.0
        %v490 = vrcp.pop %v489
        %v491 = vmul.f32 %v489, %v490
        %v492 = vsub.f32 1.0, %v491
        %v493 = vmul.f32 %v490, %v492
        %v494 = vadd.f32 %v490, %v493
        %vm495 = vweird.f32 %v489
        %vm496 = vweird.f32 %v490
        %vm497 = vmor %vm495, %vm496
        %v498 = vsel %vm497, %v490, %v494
        %v499 = vand.u32 2147483647, %v489
        %vm500 = vcmp.eq.f32.partialorder %v499, 8.507059e+37
        %v501 = vand.u32 %v489, 2147483648
        %v502 = vor.u32 1.1754944e-38, %v501
        %v503 = vsel %vm500, %v502, %v498
        %v504 = vmul.f32 %v479, %v503
        %v505 = vmin.f32 %v504, 1.0
        %v506 = vmax.f32 %v505, -1.0
        %v507 = vadd.f32 %v506, 1.0
        %v508 = vmul.f32 %v465, %v507
        %v509 = vpack.c.bf16 %v508, %v508
        %v510 = vld [vmem:[%s3] sm:$0xf]
        %v511 = vld [vmem:[%s3 + $0x4] sm:$0xf]
        %v512 = vld [vmem:[%s3 + $0x8] sm:$0xf]
        %v513 = vld [vmem:[%s3 + $0xc] sm:$0xf]
        %v514 = vld [vmem:[%s3 + $0x10] sm:$0xf]
        %v515 = vld [vmem:[%s3 + $0x14] sm:$0xf]
        %v516 = vld [vmem:[%s3 + $0x18] sm:$0xf]
        %v517 = vld [vmem:[%s3 + $0x1c] sm:$0xf]
        %v518 = vld [vmem:[%s4] sm:$0x1]
        %v520 = vperm.slane %v518, 0
        %v530 = vunpack.c.l.b16 %v510
        %v531 = vunpack.c.l.b16 %v511
        %v532 = vunpack.c.l.b16 %v512
        %v533 = vunpack.c.l.b16 %v513
        %v534 = vunpack.c.l.b16 %v514
        %v535 = vunpack.c.l.b16 %v515
        %v536 = vunpack.c.l.b16 %v516
        %v537 = vunpack.c.l.b16 %v517
        %v538 = vpack.c.b16 %v531, %v530
        %v539 = vpack.c.b16 %v533, %v532
        %v540 = vpack.c.b16 %v535, %v534
        %v541 = vpack.c.b16 %v537, %v536
        %vm546 = vcmask 523264
        %v548 = vsel %vm546, %v509, 0
        %550 = vmatpush.bf16.msra.mxu0 0
        %551 = vmatpush.bf16.msra.mxu0 0
        %552 = vmatpush.bf16.msra.mxu0 0
        %553 = vmatpush.bf16.msra.mxu0 0
        %554 = vmatpush.bf16.msra.mxu0 %v541
        %555 = vmatpush.bf16.msra.mxu0 %v540
        %556 = vmatpush.bf16.msra.mxu0 %v539
        %557 = vmatpush.bf16.msra.mxu0 %v538
        %558 = vmatmul.bf16.gmra.mxu0 %v548
        %v559 = vpop.f32.mrf.mxu0
        %v560 = vadd.f32 %v520, %v559
        %v561 = vpop.f32.mrf.mxu0
        %562 = vdwg.mxu0
        %v563 = vmul.f32 %v560, 0.5
        %v564 = vmul.f32 %v560, 0.70710677
        %v565 = vmul.f32 %v564, %v564
        %v566 = vmin.f32 16.0, %v565
        %v567 = vmul.f32 %v566, 2.1237322e-06
        %v568 = vadd.f32 %v567, 0.00028619796
        %v569 = vmul.f32 %v566, %v568
        %v570 = vadd.f32 %v569, 0.0036580483
        %v571 = vmul.f32 %v566, %v570
        %v572 = vadd.f32 %v571, 0.05243302
        %v573 = vmul.f32 %v566, %v572
        %v574 = vadd.f32 %v573, 0.18741608
        %v575 = vmul.f32 %v566, %v574
        %v576 = vadd.f32 %v575, 1.1283791
        %v577 = vmul.f32 %v564, %v576
        %v578 = vmul.f32 %v566, 3.8918573e-05
        %v579 = vadd.f32 %v578, 0.001143296
        %v580 = vmul.f32 %v566, %v579
        %v581 = vadd.f32 %v580, 0.014752088
        %v582 = vmul.f32 %v566, %v581
        %v583 = vadd.f32 %v582, 0.112945676
        %v584 = vmul.f32 %v566, %v583
        %v585 = vadd.f32 %v584, 0.4994258
        %v586 = vmul.f32 %v566, %v585
        %v587 = vadd.f32 %v586, 1.0
        %v588 = vrcp.pop %v587
        %v589 = vmul.f32 %v587, %v588
        %v590 = vsub.f32 1.0, %v589
        %v591 = vmul.f32 %v588, %v590
        %v592 = vadd.f32 %v588, %v591
        %vm593 = vweird.f32 %v587
        %vm594 = vweird.f32 %v588
        %vm595 = vmor %vm593, %vm594
        %v596 = vsel %vm595, %v588, %v592
        %v597 = vand.u32 2147483647, %v587
        %vm598 = vcmp.eq.f32.partialorder %v597, 8.507059e+37
        %v599 = vand.u32 %v587, 2147483648
        %v600 = vor.u32 1.1754944e-38, %v599
        %v601 = vsel %vm598, %v600, %v596
        %v602 = vmul.f32 %v577, %v601
        %v603 = vmin.f32 %v602, 1.0
        %v604 = vmax.f32 %v603, -1.0
        %v605 = vadd.f32 %v604, 1.0
        %v606 = vmul.f32 %v563, %v605
        %v607 = vpack.c.bf16 %v606, %v606
        %v608 = vld [vmem:[%s5] sm:$0xf]
        %v609 = vld [vmem:[%s5 + $0x4] sm:$0xf]
        %v610 = vld [vmem:[%s5 + $0x8] sm:$0xf]
        %v611 = vld [vmem:[%s5 + $0xc] sm:$0xf]
        %v612 = vld [vmem:[%s5 + $0x10] sm:$0xf]
        %v613 = vld [vmem:[%s5 + $0x14] sm:$0xf]
        %v614 = vld [vmem:[%s5 + $0x18] sm:$0xf]
        %v615 = vld [vmem:[%s5 + $0x1c] sm:$0xf]
        %v616 = vld [vmem:[%s6] sm:$0x1]
        %v618 = vperm.slane %v616, 0
        %v628 = vunpack.c.l.b16 %v608
        %v629 = vunpack.c.l.b16 %v609
        %v630 = vunpack.c.l.b16 %v610
        %v631 = vunpack.c.l.b16 %v611
        %v632 = vunpack.c.l.b16 %v612
        %v633 = vunpack.c.l.b16 %v613
        %v634 = vunpack.c.l.b16 %v614
        %v635 = vunpack.c.l.b16 %v615
        %v636 = vpack.c.b16 %v629, %v628
        %v637 = vpack.c.b16 %v631, %v630
        %v638 = vpack.c.b16 %v633, %v632
        %v639 = vpack.c.b16 %v635, %v634
        %v645 = vsel %vm546, %v607, 0
        %647 = vmatpush.bf16.msra.mxu0 0
        %648 = vmatpush.bf16.msra.mxu0 0
        %649 = vmatpush.bf16.msra.mxu0 0
        %650 = vmatpush.bf16.msra.mxu0 0
        %651 = vmatpush.bf16.msra.mxu0 %v639
        %652 = vmatpush.bf16.msra.mxu0 %v638
        %653 = vmatpush.bf16.msra.mxu0 %v637
        %654 = vmatpush.bf16.msra.mxu0 %v636
        %655 = vmatmul.bf16.gmra.mxu0 %v645
        %v656 = vpop.f32.mrf.mxu0
        %v657 = vadd.f32 %v618, %v656
        %v658 = vpop.f32.mrf.mxu0
        %659 = vdwg.mxu0
        %v660 = vmul.f32 %v657, 0.5
        %v661 = vmul.f32 %v657, 0.70710677
        %v662 = vmul.f32 %v661, %v661
        %v663 = vmin.f32 16.0, %v662
        %v664 = vmul.f32 %v663, 2.1237322e-06
        %v665 = vadd.f32 %v664, 0.00028619796
        %v666 = vmul.f32 %v663, %v665
        %v667 = vadd.f32 %v666, 0.0036580483
        %v668 = vmul.f32 %v663, %v667
        %v669 = vadd.f32 %v668, 0.05243302
        %v670 = vmul.f32 %v663, %v669
        %v671 = vadd.f32 %v670, 0.18741608
        %v672 = vmul.f32 %v663, %v671
        %v673 = vadd.f32 %v672, 1.1283791
        %v674 = vmul.f32 %v661, %v673
        %v675 = vmul.f32 %v663, 3.8918573e-05
        %v676 = vadd.f32 %v675, 0.001143296
        %v677 = vmul.f32 %v663, %v676
        %v678 = vadd.f32 %v677, 0.014752088
        %v679 = vmul.f32 %v663, %v678
        %v680 = vadd.f32 %v679, 0.112945676
        %v681 = vmul.f32 %v663, %v680
        %v682 = vadd.f32 %v681, 0.4994258
        %v683 = vmul.f32 %v663, %v682
        %v684 = vadd.f32 %v683, 1.0
        %v685 = vrcp.pop %v684
        %v686 = vmul.f32 %v684, %v685
        %v687 = vsub.f32 1.0, %v686
        %v688 = vmul.f32 %v685, %v687
        %v689 = vadd.f32 %v685, %v688
        %vm690 = vweird.f32 %v684
        %vm691 = vweird.f32 %v685
        %vm692 = vmor %vm690, %vm691
        %v693 = vsel %vm692, %v685, %v689
        %v694 = vand.u32 2147483647, %v684
        %vm695 = vcmp.eq.f32.partialorder %v694, 8.507059e+37
        %v696 = vand.u32 %v684, 2147483648
        %v697 = vor.u32 1.1754944e-38, %v696
        %v698 = vsel %vm695, %v697, %v693
        %v699 = vmul.f32 %v674, %v698
        %v700 = vmin.f32 %v699, 1.0
        %v701 = vmax.f32 %v700, -1.0
        %v702 = vadd.f32 %v701, 1.0
        %v703 = vmul.f32 %v660, %v702
        %v704 = vpack.c.bf16 %v703, %v703
        %v705 = vld [vmem:[%s7] sm:$0xf]
        %v706 = vld [vmem:[%s7 + $0x4] sm:$0xf]
        %v707 = vld [vmem:[%s7 + $0x8] sm:$0xf]
        %v708 = vld [vmem:[%s7 + $0xc] sm:$0xf]
        %v709 = vld [vmem:[%s7 + $0x10] sm:$0xf]
        %v710 = vld [vmem:[%s7 + $0x14] sm:$0xf]
        %v711 = vld [vmem:[%s7 + $0x18] sm:$0xf]
        %v712 = vld [vmem:[%s7 + $0x1c] sm:$0xf]
        %v713 = vld [vmem:[%s8] sm:$0x1]
        %v715 = vperm.slane %v713, 0
        %v725 = vunpack.c.l.b16 %v705
        %v726 = vunpack.c.l.b16 %v706
        %v727 = vunpack.c.l.b16 %v707
        %v728 = vunpack.c.l.b16 %v708
        %v729 = vunpack.c.l.b16 %v709
        %v730 = vunpack.c.l.b16 %v710
        %v731 = vunpack.c.l.b16 %v711
        %v732 = vunpack.c.l.b16 %v712
        %v733 = vpack.c.b16 %v726, %v725
        %v734 = vpack.c.b16 %v728, %v727
        %v735 = vpack.c.b16 %v730, %v729
        %v736 = vpack.c.b16 %v732, %v731
        %v742 = vsel %vm546, %v704, 0
        %744 = vmatpush.bf16.msra.mxu0 0
        %745 = vmatpush.bf16.msra.mxu0 0
        %746 = vmatpush.bf16.msra.mxu0 0
        %747 = vmatpush.bf16.msra.mxu0 0
        %748 = vmatpush.bf16.msra.mxu0 %v736
        %749 = vmatpush.bf16.msra.mxu0 %v735
        %750 = vmatpush.bf16.msra.mxu0 %v734
        %751 = vmatpush.bf16.msra.mxu0 %v733
        %752 = vmatmul.bf16.gmra.mxu0 %v742
        %v753 = vpop.f32.mrf.mxu0
        %v754 = vadd.f32 %v715, %v753
        %v755 = vpop.f32.mrf.mxu0
        %756 = vdwg.mxu0
        %v757 = vmul.f32 %v754, 0.5
        %v758 = vmul.f32 %v754, 0.70710677
        %v759 = vmul.f32 %v758, %v758
        %v760 = vmin.f32 16.0, %v759
        %v761 = vmul.f32 %v760, 2.1237322e-06
        %v762 = vadd.f32 %v761, 0.00028619796
        %v763 = vmul.f32 %v760, %v762
        %v764 = vadd.f32 %v763, 0.0036580483
        %v765 = vmul.f32 %v760, %v764
        %v766 = vadd.f32 %v765, 0.05243302
        %v767 = vmul.f32 %v760, %v766
        %v768 = vadd.f32 %v767, 0.18741608
        %v769 = vmul.f32 %v760, %v768
        %v770 = vadd.f32 %v769, 1.1283791
        %v771 = vmul.f32 %v758, %v770
        %v772 = vmul.f32 %v760, 3.8918573e-05
        %v773 = vadd.f32 %v772, 0.001143296
        %v774 = vmul.f32 %v760, %v773
        %v775 = vadd.f32 %v774, 0.014752088
        %v776 = vmul.f32 %v760, %v775
        %v777 = vadd.f32 %v776, 0.112945676
        %v778 = vmul.f32 %v760, %v777
        %v779 = vadd.f32 %v778, 0.4994258
        %v780 = vmul.f32 %v760, %v779
        %v781 = vadd.f32 %v780, 1.0
        %v782 = vrcp.pop %v781
        %v783 = vmul.f32 %v781, %v782
        %v784 = vsub.f32 1.0, %v783
        %v785 = vmul.f32 %v782, %v784
        %v786 = vadd.f32 %v782, %v785
        %vm787 = vweird.f32 %v781
        %vm788 = vweird.f32 %v782
        %vm789 = vmor %vm787, %vm788
        %v790 = vsel %vm789, %v782, %v786
        %v791 = vand.u32 2147483647, %v781
        %vm792 = vcmp.eq.f32.partialorder %v791, 8.507059e+37
        %v793 = vand.u32 %v781, 2147483648
        %v794 = vor.u32 1.1754944e-38, %v793
        %v795 = vsel %vm792, %v794, %v790
        %v796 = vmul.f32 %v771, %v795
        %v797 = vmin.f32 %v796, 1.0
        %v798 = vmax.f32 %v797, -1.0
        %v799 = vadd.f32 %v798, 1.0
        %v800 = vmul.f32 %v757, %v799
        %v801 = vpack.c.bf16 %v800, %v800
        %v802 = vld [vmem:[%s9] sm:$0xf]
        %v803 = vld [vmem:[%s9 + $0x4] sm:$0xf]
        %v804 = vld [vmem:[%s9 + $0x8] sm:$0xf]
        %v805 = vld [vmem:[%s9 + $0xc] sm:$0xf]
        %v806 = vld [vmem:[%s9 + $0x10] sm:$0xf]
        %v807 = vld [vmem:[%s9 + $0x14] sm:$0xf]
        %v808 = vld [vmem:[%s9 + $0x18] sm:$0xf]
        %v809 = vld [vmem:[%s9 + $0x1c] sm:$0xf]
        %v810 = vld [vmem:[%s10] sm:$0x1]
        %v812 = vperm.slane %v810, 0
        %v822 = vunpack.c.l.b16 %v802
        %v823 = vunpack.c.l.b16 %v803
        %v824 = vunpack.c.l.b16 %v804
        %v825 = vunpack.c.l.b16 %v805
        %v826 = vunpack.c.l.b16 %v806
        %v827 = vunpack.c.l.b16 %v807
        %v828 = vunpack.c.l.b16 %v808
        %v829 = vunpack.c.l.b16 %v809
        %v830 = vpack.c.b16 %v823, %v822
        %v831 = vpack.c.b16 %v825, %v824
        %v832 = vpack.c.b16 %v827, %v826
        %v833 = vpack.c.b16 %v829, %v828
        %v839 = vsel %vm546, %v801, 0
        %841 = vmatpush.bf16.msra.mxu0 0
        %842 = vmatpush.bf16.msra.mxu0 0
        %843 = vmatpush.bf16.msra.mxu0 0
        %844 = vmatpush.bf16.msra.mxu0 0
        %845 = vmatpush.bf16.msra.mxu0 %v833
        %846 = vmatpush.bf16.msra.mxu0 %v832
        %847 = vmatpush.bf16.msra.mxu0 %v831
        %848 = vmatpush.bf16.msra.mxu0 %v830
        %849 = vmatmul.bf16.gmra.mxu0 %v839
        %v850 = vpop.f32.mrf.mxu0
        %v851 = vadd.f32 %v812, %v850
        %v852 = vpop.f32.mrf.mxu0
        %853 = vdwg.mxu0
        %v854 = vunpack.c.l.bf16 %v383
        %v855 = vadd.f32 %v854, %v851
        %857 = vrot.lane.b32.xlu0 %v851, 62
        %v858 = vpop.permute.xlu0 %857
        %v860 = vmul.f32 %v854, %v858
        %862 = vrot.lane.b32.xlu0 %v860, 119
        %v863 = vpop.permute.xlu0 %862
        %v865 = vadd.f32 %v860, %v863
        %866 = vrot.lane.b32.xlu0 %v860, 110
        %v867 = vpop.permute.xlu0 %866
        %v869 = vadd.f32 %v865, %v867
        %vm870 = vcmask 72704
        %871 = vst.msk [vmem:[%s377] sm:$0xff] %vm870, %v855
        %873 = vrot.lane.b32.xlu0 %v869, 66
        %v874 = vpop.permute.xlu0 %873
        %vm876 = vcmask 146504
        %877 = vst.msk [vmem:[%s377] sm:$0xff] %vm876, %v874
        %s878 = sand.u32 %s269, 1
        %s879 = scalar_lea.sflag [#allocation3], %s878
        %s880 = sand.u32 %s269, 1
        %s881 = smul.addr %s880, 8
        %s882 = scalar_lea.vmem [#allocation2], %s881
        // Predicated region
        $region65: #{tpu_custom_call.1} parent=63 // pred_check
          %p883 = pneg %p279
        $region66: #{tpu_custom_call.1} parent=63 // pred_check_branch
          %885 = sbr.rel (%p883) target = $region68
        $region67: #{tpu_custom_call.1} parent=63 // pred_region
          %887 = vsyncadd %s879, 0
          %s888 = smul.addr %s25, 8
          %s889 = scalar_lea.hbm %s11, %s888
          %s891 = sshll.u32 %s882, 4
          %s892 = int_to_ptr.vmem [resolvable:$true] %s891
          %s893 = sshll.u32 %s889, 4
          %s894 = int_to_ptr.hbm [resolvable:$true] %s893
          %896 = dma.vmem_to_hbm [thread:$0]  %s892, 128, %s894, %s879
        $region68: #{tpu_custom_call.1} parent=63 // pred_fallthru
          _
      $region64: #{tpu_custom_call.1} parent=5 // pred_fallthru
        _
      %p897 = scmp.le.s32.totalorder 2, %s20
      // Predicated region
      $region69: #{tpu_custom_call.1} parent=5 // pred_check
        %p898 = pneg %p897
      $region70: #{tpu_custom_call.1} parent=5 // pred_check_branch
        %900 = sbr.rel (%p898) target = $region72
      $region71: #{tpu_custom_call.1} parent=5 // pred_region
        %s901 = ssub.s32 %s20, 2
        // Predicated region
        $region73: #{tpu_custom_call.1} parent=71 // pred_check
          %p902 = pneg %p285
        $region74: #{tpu_custom_call.1} parent=71 // pred_check_branch
          %904 = sbr.rel (%p902) target = $region76
        $region75: #{tpu_custom_call.1} parent=71 // pred_region
          %s905 = sand.u32 %s270, 1
          %s906 = scalar_lea.sflag [#allocation3], %s905
          %s907 = sand.u32 %s270, 1
          %s908 = smul.addr %s907, 8
          %s909 = scalar_lea.vmem [#allocation2], %s908
          %911 = dma.done %s906, 128
        $region76: #{tpu_custom_call.1} parent=71 // pred_fallthru
          _
      $region72: #{tpu_custom_call.1} parent=5 // pred_fallthru
        _
    $region6: #{tpu_custom_call.1} parent=1 // loop_footer
      %s24 = sadd.s32 1, %s20
    $region7: #{tpu_custom_call.1} parent=1 // loop_footer_branch
      %19 = sbr.rel target = $region3
    $region8: #{tpu_custom_call.1} parent=1 // loop_exit
      _
    %912 = vsyncpa [#allocation3], 1
    %s913 = scalar_lea.sflag [#allocation3], 1
    %914 = vsyncpa %s913, 1

</llo_original>
